<compile_context>
chip_gen: v6e
topology: v6e:2x2x1
jax: 0.10.0
libtpu: 0.0.40
codegen_flags: <defaults>
</compile_context>

<pallas_src>
import math
import numpy as np
import jax
import jax.numpy as jnp
from jax.experimental import pallas as pl
from jax.experimental.pallas import tpu as pltpu  # noqa: F401  (TPU-specific tuning hooks)

NUM_LAYERS = 22      # fixed by the module: sparsity_ratio = zeros([1, 22])
C_MAX      = 128     # max out_channels across wrapped layers (lane width)
HIDDEN     = 32      # hidden width of the hardware MLP

# hard-concrete distribution constants (standard BAR / L0 settings)
GAMMA = -0.1
ZETA  = 1.1
BETA  = 2.0 / 3.0
SHIFT = BETA * math.log(-GAMMA / ZETA)   # compile-time constant folded into the kernel

# Storage dtype of the gate parameters handed to the kernel (math stays f32 in-kernel).
LOG_ALPHA_DTYPE = jnp.bfloat16
# Exact reciprocal keeps the final result well inside 1e-5 of the f32 reference;
# set True to move the divide onto the (otherwise idle) EUP vrcp slot.
APPROX_RECIP = False

# Packed-parameter layout: rows 0..21 = W1 / out_channels[:,None], row 22 = b1,
# row 23 = W2^T, row 24[0] = b2.  One [25, HIDDEN] VMEM block.
P_ROWS = NUM_LAYERS + 3


def latency_loss_kernel(log_alpha_ref, params_ref, o_ref):
    # Load bf16-stored gate params, upcast immediately; all arithmetic is f32.
    x = log_alpha_ref[...].astype(jnp.float32)                        # [22, 128]

    # alive_prob = sigmoid(x - SHIFT) written as exp + reciprocal.
    # Padded channels are stored as -1e9 => exp(+huge) -> inf, 1/(1+inf) -> 0 exactly.
    alive_prob  = pl.reciprocal(1.0 + jnp.exp(SHIFT - x), approx=APPROX_RECIP)
    alive_count = jnp.sum(alive_prob, axis=-1, keepdims=True)         # [22, 1] (XLU lane reduce)

    params = params_ref[...]                                          # [25, 32] f32
    w1s = params[0:NUM_LAYERS, :]                     # [22, H], pre-scaled by 1/out_channels
    b1  = params[NUM_LAYERS:NUM_LAYERS + 1, :]        # [1, H]
    w2t = params[NUM_LAYERS + 1:NUM_LAYERS + 2, :]    # [1, H]  (W2 transposed)
    b2  = params[NUM_LAYERS + 2:NUM_LAYERS + 3, 0:1]  # [1, 1]

    # h = sparsity_ratio @ W1 + b1   (1/out_channels folded into w1s); VPU + sublane reduce
    h = jnp.sum(alive_count * w1s, axis=0, keepdims=True) + b1        # [1, H]
    h = jnp.maximum(h, 0.0)                                           # ReLU

    # out = h @ W2 + b2 as VPU multiply + lane reduce (no MXU for a 1x32x1 matmul)
    out = jnp.sum(h * w2t, axis=-1, keepdims=True) + b2               # [1, 1]
    latency = jnp.clip(out, 0.0, 1.0)

    # Lane-dense broadcast store (unmasked vst); wrapper slices to shape (1,).
    o_ref[...] = jnp.broadcast_to(latency, o_ref.shape)


def pack_hardware_model(w1, b1, w2, b2, out_channels):
    """One-time packing of the hardware-model MLP params into a single [25, H] array,
    with 1/out_channels folded into the rows of W1."""
    w1_scaled = w1 / out_channels.astype(jnp.float32)[:, None]        # [22, H]
    params = jnp.zeros((P_ROWS, HIDDEN), jnp.float32)
    params = params.at[0:NUM_LAYERS, :].set(w1_scaled)
    params = params.at[NUM_LAYERS, :].set(b1[0])
    params = params.at[NUM_LAYERS + 1, :].set(w2[:, 0])
    params = params.at[NUM_LAYERS + 2, 0].set(b2[0, 0])
    return params


def store_log_alpha(log_alpha, mask):
    """ONE-TIME producer-side step (not per training step): padded gate channels are
    kept permanently at -1e9 so sigmoid() == 0 exactly, and the buffer is stored in
    bf16 to halve the kernel's main input DMA."""
    return jnp.where(mask > 0, log_alpha, jnp.float32(-1e9)).astype(LOG_ALPHA_DTYPE)


@jax.jit
def latency_loss(log_alpha_stored, params_packed):
    """Returns latency of shape (1,) -- matches `torch.clip(self.hwm(sparsity_ratio)[0], 0, 1)`."""
    full = lambda a: pl.BlockSpec(a.shape, lambda: (0,) * a.ndim)
    out = pl.pallas_call(
        latency_loss_kernel,
        out_shape=jax.ShapeDtypeStruct((1, C_MAX), jnp.float32),
        grid=(),
        in_specs=[full(log_alpha_stored), full(params_packed)],
        out_specs=pl.BlockSpec((1, C_MAX), lambda: (0, 0)),
        cost_estimate=pl.CostEstimate(
            flops=12_800,
            transcendentals=NUM_LAYERS * C_MAX,                 # 2816 exp
            bytes_accessed=NUM_LAYERS * C_MAX * 2               # bf16 log_alpha
                           + P_ROWS * HIDDEN * 4                # packed MLP params
                           + C_MAX * 4),                        # output tile
    )(log_alpha_stored, params_packed)
    return out[0, :1]   # shape (1,), like torch `hwm(x)[0]`


def _reference(log_alpha_f32, mask, out_channels, w1, b1, w2, b2):
    shift = BETA * np.log(-GAMMA / ZETA)
    p = jax.nn.sigmoid(log_alpha_f32 - shift) * mask
    ratio = jnp.sum(p, axis=-1) / out_channels.astype(jnp.float32)    # [22]
    sr = ratio.reshape(1, NUM_LAYERS)
    h = jnp.maximum(sr @ w1 + b1, 0.0)
    return jnp.clip((h @ w2 + b2)[0], 0.0, 1.0)


if __name__ == "__main__":
    key = jax.random.PRNGKey(0)
    k_la, k_w1, k_b1, k_w2, k_b2 = jax.random.split(key, 5)

    # Deterministic synthetic per-layer gate parameters (BARStructuredWrapper.log_alpha)
    # with varying out_channels per layer, padded to C_MAX.
    out_channels = jnp.array(
        [16, 32, 64, 128, 32, 64, 128, 16, 64, 128, 32,
         128, 16, 32, 64, 128, 64, 32, 16, 128, 64, 32], dtype=jnp.int32)
    assert out_channels.shape[0] == NUM_LAYERS

    log_alpha = jax.random.normal(k_la, (NUM_LAYERS, C_MAX), dtype=jnp.float32)
    ch_idx = jnp.arange(C_MAX, dtype=jnp.int32)[None, :]
    mask = (ch_idx < out_channels[:, None]).astype(jnp.float32)

    # Deterministic synthetic hardware-model MLP: 22 -> HIDDEN -> 1 (frozen, .eval()).
    w1 = jax.random.normal(k_w1, (NUM_LAYERS, HIDDEN), dtype=jnp.float32) * 0.3
    b1 = jax.random.normal(k_b1, (1, HIDDEN), dtype=jnp.float32) * 0.1
    w2 = jax.random.normal(k_w2, (HIDDEN, 1), dtype=jnp.float32) * 0.3
    b2 = jax.random.normal(k_b2, (1, 1), dtype=jnp.float32) * 0.1

    # One-time prep (outside the per-step path): packed MLP params + permanently
    # masked bf16 gate buffer => the kernel needs exactly 2 input DMAs and nothing else.
    params_packed    = pack_hardware_model(w1, b1, w2, b2, out_channels)
    log_alpha_stored = store_log_alpha(log_alpha, mask)

    latency = latency_loss(log_alpha_stored, params_packed)
    jax.block_until_ready(latency)

    # Reference sees the same stored (bf16-quantized, masked) gate values.
    ref = _reference(log_alpha_stored.astype(jnp.float32), mask, out_channels, w1, b1, w2, b2)
    np.testing.assert_allclose(np.asarray(latency), np.asarray(ref), rtol=1e-5, atol=1e-5)

    print("KERNEL_OK")
</pallas_src>

<mosaic_0001>
module attributes {stable_mosaic.version = 11 : i64} {
  func.func @latency_loss_kernel(%arg0: memref<22x128xbf16, #tpu.memory_space<vmem>>, %arg1: memref<25x32xf32, #tpu.memory_space<vmem>>, %arg2: memref<1x128xf32, #tpu.memory_space<vmem>>) attributes {dimension_semantics = [], scalar_prefetch = 0 : i64, scratch_operands = 0 : i64, tpu.core_type = #tpu.core_type<tc>} {
    %c0 = arith.constant 0 : index
    %c0_0 = arith.constant 0 : index
    %0 = vector.load %arg0[%c0, %c0_0] : memref<22x128xbf16, #tpu.memory_space<vmem>>, vector<22x128xbf16>
    %1 = arith.extf %0 : vector<22x128xbf16> to vector<22x128xf32>
    %cst = arith.constant -1.59859681 : f32
    %2 = vector.broadcast %cst : f32 to vector<22x128xf32>
    %3 = arith.subf %2, %1 : vector<22x128xf32>
    %4 = math.exp %3 : vector<22x128xf32>
    %cst_1 = arith.constant 1.000000e+00 : f32
    %5 = vector.broadcast %cst_1 : f32 to vector<22x128xf32>
    %6 = arith.addf %5, %4 : vector<22x128xf32>
    %7 = tpu.reciprocal %6 : vector<22x128xf32> -> vector<22x128xf32>
    %cst_2 = arith.constant dense<0.000000e+00> : vector<22xf32>
    %8 = vector.multi_reduction <add>, %7, %cst_2 [1] : vector<22x128xf32> to vector<22xf32>
    %9 = vector.shape_cast %8 : vector<22xf32> to vector<22x1xf32>
    %c0_3 = arith.constant 0 : index
    %c0_4 = arith.constant 0 : index
    %10 = vector.load %arg1[%c0_3, %c0_4] : memref<25x32xf32, #tpu.memory_space<vmem>>, vector<25x32xf32>
    %11 = vector.extract_strided_slice %10 {offsets = [0, 0], sizes = [22, 32], strides = [1, 1]} : vector<25x32xf32> to vector<22x32xf32>
    %12 = vector.extract_strided_slice %10 {offsets = [22, 0], sizes = [1, 32], strides = [1, 1]} : vector<25x32xf32> to vector<1x32xf32>
    %13 = vector.extract_strided_slice %10 {offsets = [23, 0], sizes = [1, 32], strides = [1, 1]} : vector<25x32xf32> to vector<1x32xf32>
    %14 = vector.extract_strided_slice %10 {offsets = [24, 0], sizes = [1, 1], strides = [1, 1]} : vector<25x32xf32> to vector<1x1xf32>
    %15 = vector.broadcast %9 : vector<22x1xf32> to vector<22x32xf32>
    %16 = arith.mulf %15, %11 : vector<22x32xf32>
    %cst_5 = arith.constant dense<0.000000e+00> : vector<32xf32>
    %17 = vector.multi_reduction <add>, %16, %cst_5 [0] : vector<22x32xf32> to vector<32xf32>
    %18 = vector.shape_cast %17 : vector<32xf32> to vector<1x32xf32>
    %19 = arith.addf %18, %12 : vector<1x32xf32>
    %cst_6 = arith.constant 0.000000e+00 : f32
    %20 = vector.broadcast %cst_6 : f32 to vector<1x32xf32>
    %21 = arith.maximumf %19, %20 : vector<1x32xf32>
    %22 = arith.mulf %21, %13 : vector<1x32xf32>
    %cst_7 = arith.constant dense<0.000000e+00> : vector<1xf32>
    %23 = vector.multi_reduction <add>, %22, %cst_7 [1] : vector<1x32xf32> to vector<1xf32>
    %24 = vector.shape_cast %23 : vector<1xf32> to vector<1x1xf32>
    %25 = arith.addf %24, %14 : vector<1x1xf32>
    %cst_8 = arith.constant 0.000000e+00 : f32
    %cst_9 = arith.constant 1.000000e+00 : f32
    %26 = vector.broadcast %cst_8 : f32 to vector<1x1xf32>
    %27 = arith.maximumf %26, %25 : vector<1x1xf32>
    %28 = vector.broadcast %cst_9 : f32 to vector<1x1xf32>
    %29 = arith.minimumf %28, %27 : vector<1x1xf32>
    %30 = vector.shape_cast %29 : vector<1x1xf32> to vector<1x1xf32>
    %31 = vector.broadcast %30 : vector<1x1xf32> to vector<1x128xf32>
    %c0_10 = arith.constant 0 : index
    %c0_11 = arith.constant 0 : index
    %32 = vector.load %arg2[%c0_10, %c0_11] : memref<1x128xf32, #tpu.memory_space<vmem>>, vector<1x128xf32>
    tpu.vector_store %arg2[%c0_10, %c0_11], %31 {strides = array<i32>} : memref<1x128xf32, #tpu.memory_space<vmem>>, vector<1x128xf32>,
    return
  }
}

</mosaic_0001>

<llo_original>
// kernel: latency_loss.1
$region0: #{latency_loss.1}
  #allocation0 [shape = 'u32[]', space=smem, size = 0x4, offset = 0x4, fixed_abs, tag = 'smem constant byte address 0x4 - core index']
  #allocation1 [shape = 'u32[144,128]{1,0:T(1,128)}', space=vmem, size = 0x12000, scoped, tag = 'internal scratch']
  %s0 = inlined_call_operand.hbm [shape: bf16[22,128], index: 0, kind: input, shape index: {}]
  %s1 = inlined_call_operand.hbm [shape: f32[25,32], index: 1, kind: input, shape index: {}]
  %s2 = inlined_call_operand.hbm [shape: f32[1,128], index: 2, kind: output, shape index: {}]
  %s3 = sld [smem:[#allocation0]]
  $region26: #{latency_loss.1} parent=0
    _
  %s5 = ssub.s32 1, %s3
  %s6 = scalar_select 0, %s5, %s3
  $region1: #{latency_loss.1} parent=0
    #allocation2 [shape = 'u8[6144]{0}', space=vmem, size = 0x1800, scoped, tag = 'input window, operand 0, single buffered']
    #allocation3 [shape = 's32[1]{0}', space=sflag, size = 0x4, scoped, tag = 'scoped memory for latency_loss.1']
    #allocation4 [shape = 's32[1]{0}', space=sflag, size = 0x4, scoped, tag = 'scoped memory for latency_loss.1']
    #allocation5 [shape = 'u8[16384]{0}', space=vmem, size = 0x4000, scoped, tag = 'input window, operand 1, single buffered']
    #allocation6 [shape = 's32[1]{0}', space=sflag, size = 0x4, scoped, tag = 'scoped memory for latency_loss.1']
    #allocation7 [shape = 'u8[512]{0}', space=vmem, size = 0x400, scoped, tag = 'output window, operand 0, single buffered']
    %7 = vsyncpa [#allocation3], 0
    %8 = vsyncpa [#allocation6], 0
    %9 = vsyncpa [#allocation4], 0
    // Predicated region
    $region2: #{latency_loss.1} parent=1 // pred_check
      _
    $region3: #{latency_loss.1} parent=1 // pred_check_branch
      %11 = sbr.rel (0) target = $region5
    $region4: #{latency_loss.1} parent=1 // pred_region
      %s13 = ssub.s32 192, 192
      %14 = vsyncadd [#allocation3], %s13
      %s15 = sshll.u32 [#allocation2], 4
      %s16 = int_to_ptr.vmem [resolvable:$true] %s15
      %21 = dma.hbm_to_vmem [thread:$0]  %s0, 192, %s16, [#allocation3], 64, 64, 4
    $region5: #{latency_loss.1} parent=1 // pred_fallthru
      _
    // Predicated region
    $region6: #{latency_loss.1} parent=1 // pred_check
      _
    $region7: #{latency_loss.1} parent=1 // pred_check_branch
      %23 = sbr.rel (0) target = $region9
    $region8: #{latency_loss.1} parent=1 // pred_region
      %s25 = ssub.s32 512, 512
      %26 = vsyncadd [#allocation6], %s25
      %s27 = sshll.u32 [#allocation5], 4
      %s28 = int_to_ptr.vmem [resolvable:$true] %s27
      %33 = dma.hbm_to_vmem [thread:$0]  %s1, 512, %s28, [#allocation6], 128, 128, 8
    $region9: #{latency_loss.1} parent=1 // pred_fallthru
      _
    // Predicated region
    $region10: #{latency_loss.1} parent=1 // pred_check
      _
    $region11: #{latency_loss.1} parent=1 // pred_check_branch
      %35 = sbr.rel (0) target = $region13
    $region12: #{latency_loss.1} parent=1 // pred_region
      %36 = dma.done [#allocation3], 192
    $region13: #{latency_loss.1} parent=1 // pred_fallthru
      _
    // Predicated region
    $region14: #{latency_loss.1} parent=1 // pred_check
      _
    $region15: #{latency_loss.1} parent=1 // pred_check_branch
      %38 = sbr.rel (0) target = $region17
    $region16: #{latency_loss.1} parent=1 // pred_region
      %39 = dma.done [#allocation6], 512
    $region17: #{latency_loss.1} parent=1 // pred_fallthru
      _
    %v40 = vld [vmem:[#allocation2] sm:$0xf]
    %v41 = vld [vmem:[#allocation2 + $0x4] sm:$0xf]
    %v42 = vld [vmem:[#allocation2 + $0x8] sm:$0x7]
    %v43 = vunpack.c.l.bf16 %v40
    %v44 = vunpack.c.l.bf16 %v41
    %v45 = vunpack.c.l.bf16 %v42
    %v46 = vsub.f32 -1.5985968, %v43
    %v47 = vsub.f32 -1.5985968, %v44
    %v48 = vsub.f32 -1.5985968, %v45
    %v49 = vmul.f32 %v46, 1.442695
    %v50 = vpow.pop %v49
    %v51 = vmul.f32 %v47, 1.442695
    %v52 = vpow.pop %v51
    %v53 = vmul.f32 %v48, 1.442695
    %v54 = vpow.pop %v53
    %v55 = vadd.f32 %v50, 1.0
    %v56 = vadd.f32 %v52, 1.0
    %v57 = vadd.f32 %v54, 1.0
    %v58 = vrcp.pop %v55
    %v59 = vrcp.pop %v56
    %v60 = vrcp.pop %v57
    %61 = vadd.xlane.f32.xlu0 %v58
    %v62 = vpop.xlane.xlu0 %61
    %63 = vadd.xlane.f32.xlu0 %v59
    %v64 = vpop.xlane.xlu0 %63
    %vm65 = vcmask 1045504
    %v66 = vsel %vm65, %v60, 0.0
    %67 = vadd.xlane.f32.xlu0 %v66
    %v68 = vpop.xlane.xlu0 %67
    %v69 = vld [vmem:[#allocation5] sm:$0xff]
    %v70 = vld [vmem:[#allocation5 + $0x8] sm:$0xff]
    %v71 = vld [vmem:[#allocation5 + $0x10] sm:$0xff]
    %v72 = vld [vmem:[#allocation5 + $0x18] sm:$0x1]
    %v73 = vmul.f32 %v62, %v69
    %v74 = vmul.f32 %v64, %v70
    %v75 = vmul.f32 %v68, %v71
    %vm76 = vcmask 261120
    %v77 = vsel %vm76, %v73, 0.0
    %v78 = vsel %vm76, %v74, 0.0
    %v79 = vadd.f32 %v77, %v78
    %vm80 = vcmask 259072
    %v81 = vsel %vm80, %v75, 0.0
    %v82 = vadd.f32 %v79, %v81
    %v83 = vrot.slane %v82, 4
    %v84 = vadd.f32 %v82, %v83
    %v85 = vrot.slane %v84, 2
    %v86 = vadd.f32 %v84, %v85
    %v87 = vrot.slane %v86, 1
    %v88 = vadd.f32 %v86, %v87
    %v89 = vadd.f32 %v88, %v71
    %v90 = vmax.f32 %v89, 0.0
    %v92 = vrot.slane %v71, 1
    %v94 = vmul.f32 %v90, %v92
    %vm95 = vcmask 260102
    %v96 = vsel %vm95, %v94, 0.0
    %97 = vadd.xlane.f32.xlu0 %v96
    %v98 = vpop.xlane.xlu0 %97
    %v100 = vrot.slane %v72, 2
    %v102 = vadd.f32 %v98, %v100
    %v103 = vmax.f32 %v102, 0.0
    %v104 = vmin.f32 %v103, 1.0
    %106 = vset.pattern.permute.xlu0 0
    %107 = vperm.xlu0 %106, %v104
    %v108 = vpop.permute.xlu0 %107
    %110 = vst [vmem:[#allocation7 - $0x6] sm:$0x40] %v108
    // Predicated region
    $region18: #{latency_loss.1} parent=1 // pred_check
      _
    $region19: #{latency_loss.1} parent=1 // pred_check_branch
      %112 = sbr.rel (0) target = $region21
    $region20: #{latency_loss.1} parent=1 // pred_region
      %s114 = ssub.s32 16, 16
      %115 = vsyncadd [#allocation4], %s114
      %s117 = sshll.u32 [#allocation7], 4
      %s118 = int_to_ptr.vmem [resolvable:$true] %s117
      %120 = dma.vmem_to_hbm [thread:$0]  %s118, 16, %s2, [#allocation4]
    $region21: #{latency_loss.1} parent=1 // pred_fallthru
      _
    // Predicated region
    $region22: #{latency_loss.1} parent=1 // pred_check
      _
    $region23: #{latency_loss.1} parent=1 // pred_check_branch
      %122 = sbr.rel (0) target = $region25
    $region24: #{latency_loss.1} parent=1 // pred_region
      %123 = dma.done [#allocation4], 16
    $region25: #{latency_loss.1} parent=1 // pred_fallthru
      _
    %124 = vsyncpa [#allocation3], 1
    %125 = vsyncpa [#allocation6], 1
    %126 = vsyncpa [#allocation4], 1

</llo_original>
